<compile_context>
chip_gen: v6e
topology: v6e:2x2x1
jax: 0.10.0
libtpu: 0.0.40
codegen_flags: <defaults>
</compile_context>

<pallas_src>
import math

import jax
import jax.numpy as jnp
from jax.experimental import pallas as pl
from jax.experimental.pallas import tpu as pltpu


LN_EPS = 1e-5   # nn.LayerNorm default
LANE = 128      # TPU lane width
SUBLANE = 16    # safe sublane granularity for bf16 blocks


def _round_up(n, m):
    return (n + m - 1) // m * m


def _device_kind():
    try:
        return jax.devices()[0].device_kind.lower()
    except Exception:
        return ""


def _auto_bf16_elementwise(kind=None):
    # v5e has no bf16 VPU -> keep elementwise math in f32 there.
    kind = _device_kind() if kind is None else kind
    return "v5" not in kind


def _auto_vmem_limit(kind):
    if "v7" in kind:
        return 48 * 1024 * 1024      # 64 MiB physical/TC -> leave headroom
    if "v5" in kind or "v6" in kind:
        return 96 * 1024 * 1024      # 128 MiB physical
    return 64 * 1024 * 1024


def _auto_tile_b(kind):
    if "v7" in kind:
        return 256
    return 512                       # v5e/v6e: bigger tile, plenty of VMEM


def _pick_batch_tile(B, tile_b, min_steps):
    """Choose (tb, b_pad, n_steps) minimizing padding waste, with >= min_steps
    grid steps (so v7x can shard the batch axis across both TensorCores)."""
    tile_b = max(SUBLANE, _round_up(tile_b, SUBLANE))
    n_steps = max(pl.cdiv(B, tile_b), 1)
    if B >= 2 * SUBLANE:
        n_steps = max(n_steps, min_steps)
    n_steps = min(n_steps, pl.cdiv(B, SUBLANE))   # no empty grid steps
    n_steps = max(n_steps, 1)
    tb = _round_up(pl.cdiv(B, n_steps), SUBLANE)
    b_pad = tb * n_steps
    return tb, b_pad, n_steps


# ---------------------------------------------------------------------------
# Kernel
# ---------------------------------------------------------------------------
def _make_kernel(hidden_real, out_real, gelu_approx, bf16_elementwise):
    """Fused 3-block MLP kernel.  hidden_real/out_real are the *unpadded*
    feature widths (LayerNorm divisors); padded lanes are masked out of the
    variance and zeroed by zero-padded gamma/beta."""
    inv_h = 1.0 / float(hidden_real)
    inv_o = 1.0 / float(out_real)
    inv_sqrt2 = 1.0 / math.sqrt(2.0)
    ew_dtype = jnp.bfloat16 if bf16_elementwise else jnp.float32

    def ln_block(h_f32, p_ref, inv_n):
        # p_ref rows: [linear-bias, ln-gamma, ln-beta, lane-mask]
        bias = p_ref[0:1, :]
        gamma = p_ref[1:2, :]
        beta = p_ref[2:3, :]
        mask = p_ref[3:4, :]
        h = h_f32 + bias                                   # f32
        mu = jnp.sum(h, axis=-1, keepdims=True) * inv_n    # padded lanes are 0
        dm = (h - mu) * mask                               # two-pass, masked
        var = jnp.sum(dm * dm, axis=-1, keepdims=True) * inv_n
        rstd = jax.lax.rsqrt(var + LN_EPS)
        y = (dm * rstd).astype(ew_dtype)
        # padded gamma/beta lanes are zero -> padded output lanes stay exactly 0
        return y * gamma.astype(ew_dtype) + beta.astype(ew_dtype)

    if gelu_approx:
        def gelu(h):                                       # tanh -> EUP slot
            return jax.nn.gelu(h, approximate=True)
    else:
        def gelu(h):                                       # exact erf (f32)
            hf = h.astype(jnp.float32)
            return (0.5 * hf * (1.0 + jax.lax.erf(hf * inv_sqrt2))).astype(ew_dtype)

    def kernel(x_ref, w1_ref, p1_ref, w2_ref, p2_ref, w3_ref, p3_ref, o_ref):
        # Block 1: Linear -> LayerNorm -> GELU  (Dropout == identity in eval)
        h = jnp.dot(x_ref[...], w1_ref[...], preferred_element_type=jnp.float32)
        h = gelu(ln_block(h, p1_ref, inv_h))

        # Block 2: Linear -> LayerNorm -> GELU
        h = jnp.dot(h.astype(jnp.bfloat16), w2_ref[...],
                    preferred_element_type=jnp.float32)
        h = gelu(ln_block(h, p2_ref, inv_h))

        # Block 3: Linear -> LayerNorm
        h = jnp.dot(h.astype(jnp.bfloat16), w3_ref[...],
                    preferred_element_type=jnp.float32)
        h = ln_block(h, p3_ref, inv_o)

        o_ref[...] = h.astype(o_ref.dtype)

    return kernel


# ---------------------------------------------------------------------------
# Wrapper
# ---------------------------------------------------------------------------
def _pack_params(bias, gamma, beta, real_w, padded_w):
    rows = []
    for a in (bias, gamma, beta):
        a = jnp.asarray(a, jnp.float32).reshape(1, -1)
        rows.append(jnp.pad(a, ((0, 0), (0, padded_w - a.shape[1]))))
    mask = (jnp.arange(padded_w) < real_w).astype(jnp.float32).reshape(1, -1)
    rows.append(mask)
    return jnp.concatenate(rows, axis=0)          # (4, padded_w) f32


def content_encoder_forward(x, params, *, tile_b=None, gelu_approx=True,
                            bf16_elementwise=None, out_dtype=jnp.float32,
                            single_buffer_weights=True):
    """x: [B, input_dim] float32.  params: dict of unpadded f32 weights (init_params)."""
    kind = _device_kind()
    if tile_b is None:
        tile_b = _auto_tile_b(kind)
    if bf16_elementwise is None:
        bf16_elementwise = _auto_bf16_elementwise(kind)
    vmem_limit = _auto_vmem_limit(kind)
    min_steps = 2 if "v7" in kind else 1          # use both TCs on v7x

    B, d_in = x.shape
    h_dim = params["w1"].shape[1]
    d_out = params["w3"].shape[1]

    # lane-dense padded feature dims
    d_in_p = _round_up(d_in, LANE)
    h_p = _round_up(h_dim, LANE)
    d_out_p = _round_up(d_out, LANE)

    tb, b_pad, n_steps = _pick_batch_tile(B, tile_b, min_steps)
    grid = (n_steps,)

    def pad2(a, rows, cols, dtype):
        a = jnp.asarray(a, dtype)
        return jnp.pad(a, ((0, rows - a.shape[0]), (0, cols - a.shape[1])))

    # activations / weights in bf16 for the MXU; LN params / biases stay f32
    xp = pad2(x, b_pad, d_in_p, jnp.bfloat16)
    w1 = pad2(params["w1"], d_in_p, h_p, jnp.bfloat16)
    w2 = pad2(params["w2"], h_p, h_p, jnp.bfloat16)
    w3 = pad2(params["w3"], h_p, d_out_p, jnp.bfloat16)
    p1 = _pack_params(params["b1"], params["g1"], params["be1"], h_dim, h_p)
    p2 = _pack_params(params["b2"], params["g2"], params["be2"], h_dim, h_p)
    p3 = _pack_params(params["b3"], params["g3"], params["be3"], d_out, d_out_p)

    kernel = _make_kernel(h_dim, d_out, gelu_approx, bf16_elementwise)

    def run(use_single_buffer):
        def const_spec(shape):
            # grid-invariant inputs: optionally single-buffered (saves VMEM)
            if use_single_buffer and hasattr(pl, "Buffered"):
                return pl.BlockSpec(shape, lambda i: (0, 0),
                                    pipeline_mode=pl.Buffered(1))
            return pl.BlockSpec(shape, lambda i: (0, 0))

        f = pl.pallas_call(
            kernel,
            out_shape=jax.ShapeDtypeStruct((b_pad, d_out_p), out_dtype),
            grid_spec=pltpu.PrefetchScalarGridSpec(
                num_scalar_prefetch=0,
                grid=grid,
                in_specs=[
                    pl.BlockSpec((tb, d_in_p), lambda i: (i, 0)),   # x tile
                    const_spec((d_in_p, h_p)), const_spec((4, h_p)),      # layer 1
                    const_spec((h_p, h_p)), const_spec((4, h_p)),         # layer 2
                    const_spec((h_p, d_out_p)), const_spec((4, d_out_p)), # layer 3
                ],
                out_specs=pl.BlockSpec((tb, d_out_p), lambda i: (i, 0)),
            ),
            compiler_params=pltpu.CompilerParams(
                dimension_semantics=("parallel",),
                vmem_limit_bytes=vmem_limit,
            ),
        )
        return f(xp, w1, p1, w2, p2, w3, p3)

    if single_buffer_weights:
        try:
            out = run(True)
        except Exception as e:  # narrow fallback: only for Buffered/pipeline_mode rejection
            msg = repr(e)
            if ("Buffered" in msg) or ("pipeline_mode" in msg) or ("buffer_count" in msg):
                out = run(False)
            else:
                raise
    else:
        out = run(False)

    return out[:B, :d_out]


# ---------------------------------------------------------------------------
# Parameter init (matches the module: Xavier-normal linear weights, zero biases,
# LayerNorm weight=1 / bias=0).  Weights are stored pre-transposed as [in, out].
# ---------------------------------------------------------------------------
def init_params(key, input_dim, hidden_dim, output_dim):
    def xavier_normal(k, fan_in, fan_out):
        std = math.sqrt(2.0 / (fan_in + fan_out))  # gain = 1.0
        return std * jax.random.normal(k, (fan_in, fan_out), dtype=jnp.float32)

    k1, k2, k3 = jax.random.split(key, 3)
    return {
        "w1": xavier_normal(k1, input_dim, hidden_dim),
        "b1": jnp.zeros((1, hidden_dim), jnp.float32),
        "g1": jnp.ones((1, hidden_dim), jnp.float32),
        "be1": jnp.zeros((1, hidden_dim), jnp.float32),
        "w2": xavier_normal(k2, hidden_dim, hidden_dim),
        "b2": jnp.zeros((1, hidden_dim), jnp.float32),
        "g2": jnp.ones((1, hidden_dim), jnp.float32),
        "be2": jnp.zeros((1, hidden_dim), jnp.float32),
        "w3": xavier_normal(k3, hidden_dim, output_dim),
        "b3": jnp.zeros((1, output_dim), jnp.float32),
        "g3": jnp.ones((1, output_dim), jnp.float32),
        "be3": jnp.zeros((1, output_dim), jnp.float32),
    }


# ---------------------------------------------------------------------------
# Pure-JAX reference (configurable to mirror the kernel numerics exactly,
# or run the full-f32 exact-erf module semantics).
# ---------------------------------------------------------------------------
def reference_forward(x, params, *, gelu_approx=True, bf16_matmul=True,
                      bf16_elementwise=True):
    mm_dtype = jnp.bfloat16 if bf16_matmul else jnp.float32
    ew_dtype = jnp.bfloat16 if bf16_elementwise else jnp.float32

    def ln(h, gamma, beta):
        mu = jnp.mean(h, axis=-1, keepdims=True)
        d = h - mu
        var = jnp.mean(d * d, axis=-1, keepdims=True)
        y = (d * jax.lax.rsqrt(var + LN_EPS)).astype(ew_dtype)
        return y * gamma.astype(ew_dtype) + beta.astype(ew_dtype)

    def gelu(h):
        if gelu_approx:
            return jax.nn.gelu(h, approximate=True)
        hf = h.astype(jnp.float32)
        return (0.5 * hf * (1.0 + jax.lax.erf(hf / math.sqrt(2.0)))).astype(ew_dtype)

    def block(h_in, w, b, g, be, last=False):
        h = jnp.dot(h_in.astype(mm_dtype), w.astype(mm_dtype),
                    preferred_element_type=jnp.float32) + b
        h = ln(h, g, be)
        return h if last else gelu(h)

    h = block(x, params["w1"], params["b1"], params["g1"], params["be1"])
    h = block(h, params["w2"], params["b2"], params["g2"], params["be2"])
    h = block(h, params["w3"], params["b3"], params["g3"], params["be3"], last=True)
    return h.astype(jnp.float32)


if __name__ == "__main__":
    input_dim, hidden_dim, output_dim = 16, 32, 32
    batch = 8

    key = jax.random.PRNGKey(0)
    k_params, k_x = jax.random.split(key)
    params = init_params(k_params, input_dim, hidden_dim, output_dim)
    x = jax.random.normal(k_x, (batch, input_dim), dtype=jnp.float32)

    use_bf16_ew = _auto_bf16_elementwise()
    out = content_encoder_forward(x, params, gelu_approx=True,
                                  bf16_elementwise=use_bf16_ew)
    out = jax.block_until_ready(out)

    assert out.shape == (batch, output_dim)

    # Tight check vs. a reference with identical bf16 / tanh-GELU numerics.
    ref_matched = reference_forward(x, params, gelu_approx=True,
                                    bf16_matmul=True, bf16_elementwise=use_bf16_ew)
    assert jnp.allclose(out, ref_matched, atol=2e-2, rtol=2e-2), \
        "mismatch vs numerics-matched JAX reference"

    # Looser check vs. the full-f32 exact-erf module semantics.
    ref_f32 = reference_forward(x, params, gelu_approx=False,
                                bf16_matmul=False, bf16_elementwise=False)
    assert jnp.allclose(out, ref_f32, atol=6e-2, rtol=6e-2), \
        "mismatch vs f32 exact-GELU JAX reference"

    print("KERNEL_OK")
</pallas_src>

<mosaic_0001>
module attributes {stable_mosaic.version = 11 : i64} {
  func.func @kernel(%arg0: i32, %arg1: memref<16x128xbf16, #tpu.memory_space<vmem>>, %arg2: memref<128x128xbf16, #tpu.memory_space<vmem>>, %arg3: memref<4x128xf32, #tpu.memory_space<vmem>>, %arg4: memref<128x128xbf16, #tpu.memory_space<vmem>>, %arg5: memref<4x128xf32, #tpu.memory_space<vmem>>, %arg6: memref<128x128xbf16, #tpu.memory_space<vmem>>, %arg7: memref<4x128xf32, #tpu.memory_space<vmem>>, %arg8: memref<16x128xf32, #tpu.memory_space<vmem>>) attributes {dimension_semantics = [#tpu.dimension_semantics<parallel>], iteration_bounds = array<i64: 1>, scalar_prefetch = 0 : i64, scratch_operands = 0 : i64, tpu.core_type = #tpu.core_type<tc>, window_params = [{transform_indices = @transform_0, window_bounds = array<i64: 16, 128>}, {pipeline_mode = #tpu.pipeline_mode<synchronous>, transform_indices = @transform_1, window_bounds = array<i64: 128, 128>}, {pipeline_mode = #tpu.pipeline_mode<synchronous>, transform_indices = @transform_2, window_bounds = array<i64: 4, 128>}, {pipeline_mode = #tpu.pipeline_mode<synchronous>, transform_indices = @transform_3, window_bounds = array<i64: 128, 128>}, {pipeline_mode = #tpu.pipeline_mode<synchronous>, transform_indices = @transform_4, window_bounds = array<i64: 4, 128>}, {pipeline_mode = #tpu.pipeline_mode<synchronous>, transform_indices = @transform_5, window_bounds = array<i64: 128, 128>}, {pipeline_mode = #tpu.pipeline_mode<synchronous>, transform_indices = @transform_6, window_bounds = array<i64: 4, 128>}, {transform_indices = @transform_7, window_bounds = array<i64: 16, 128>}]} {
    %c0 = arith.constant 0 : index
    %c0_0 = arith.constant 0 : index
    %0 = vector.load %arg1[%c0, %c0_0] : memref<16x128xbf16, #tpu.memory_space<vmem>>, vector<16x128xbf16>
    %c0_1 = arith.constant 0 : index
    %c0_2 = arith.constant 0 : index
    %1 = vector.load %arg2[%c0_1, %c0_2] : memref<128x128xbf16, #tpu.memory_space<vmem>>, vector<128x128xbf16>
    %cst = arith.constant dense<0.000000e+00> : vector<16x128xf32>
    %2 = tpu.matmul %0, %1, %cst {dimension_numbers = #tpu.dot_dimension_numbers<[1], [0], [0], [1], [0, 0, 1, 1], [], []>} : vector<16x128xbf16>, vector<128x128xbf16>, vector<16x128xf32> -> vector<16x128xf32>
    %c0_3 = arith.constant 0 : index
    %c0_4 = arith.constant 0 : index
    %3 = vector.load %arg3[%c0_3, %c0_4] : memref<4x128xf32, #tpu.memory_space<vmem>>, vector<1x128xf32>
    %c1 = arith.constant 1 : index
    %c0_5 = arith.constant 0 : index
    %4 = vector.load %arg3[%c1, %c0_5] : memref<4x128xf32, #tpu.memory_space<vmem>>, vector<1x128xf32>
    %c2 = arith.constant 2 : index
    %c0_6 = arith.constant 0 : index
    %5 = vector.load %arg3[%c2, %c0_6] : memref<4x128xf32, #tpu.memory_space<vmem>>, vector<1x128xf32>
    %c3 = arith.constant 3 : index
    %c0_7 = arith.constant 0 : index
    %6 = vector.load %arg3[%c3, %c0_7] : memref<4x128xf32, #tpu.memory_space<vmem>>, vector<1x128xf32>
    %7 = vector.broadcast %3 : vector<1x128xf32> to vector<16x128xf32>
    %8 = arith.addf %2, %7 : vector<16x128xf32>
    %cst_8 = arith.constant dense<0.000000e+00> : vector<16xf32>
    %9 = vector.multi_reduction <add>, %8, %cst_8 [1] : vector<16x128xf32> to vector<16xf32>
    %10 = vector.shape_cast %9 : vector<16xf32> to vector<16x1xf32>
    %cst_9 = arith.constant 3.125000e-02 : f32
    %11 = vector.broadcast %cst_9 : f32 to vector<16x1xf32>
    %12 = arith.mulf %10, %11 : vector<16x1xf32>
    %13 = vector.broadcast %12 : vector<16x1xf32> to vector<16x128xf32>
    %14 = arith.subf %8, %13 : vector<16x128xf32>
    %15 = vector.broadcast %6 : vector<1x128xf32> to vector<16x128xf32>
    %16 = arith.mulf %14, %15 : vector<16x128xf32>
    %17 = arith.mulf %16, %16 : vector<16x128xf32>
    %cst_10 = arith.constant dense<0.000000e+00> : vector<16xf32>
    %18 = vector.multi_reduction <add>, %17, %cst_10 [1] : vector<16x128xf32> to vector<16xf32>
    %19 = vector.shape_cast %18 : vector<16xf32> to vector<16x1xf32>
    %cst_11 = arith.constant 3.125000e-02 : f32
    %20 = vector.broadcast %cst_11 : f32 to vector<16x1xf32>
    %21 = arith.mulf %19, %20 : vector<16x1xf32>
    %cst_12 = arith.constant 9.99999974E-6 : f32
    %22 = vector.broadcast %cst_12 : f32 to vector<16x1xf32>
    %23 = arith.addf %21, %22 : vector<16x1xf32>
    %24 = math.rsqrt %23 : vector<16x1xf32>
    %25 = vector.broadcast %24 : vector<16x1xf32> to vector<16x128xf32>
    %26 = arith.mulf %16, %25 : vector<16x128xf32>
    %27 = arith.truncf %26 : vector<16x128xf32> to vector<16x128xbf16>
    %28 = arith.truncf %4 : vector<1x128xf32> to vector<1x128xbf16>
    %29 = vector.broadcast %28 : vector<1x128xbf16> to vector<16x128xbf16>
    %30 = arith.mulf %27, %29 : vector<16x128xbf16>
    %31 = arith.truncf %5 : vector<1x128xf32> to vector<1x128xbf16>
    %32 = vector.broadcast %31 : vector<1x128xbf16> to vector<16x128xbf16>
    %33 = arith.addf %30, %32 : vector<16x128xbf16>
    %34 = arith.mulf %33, %33 : vector<16x128xbf16>
    %35 = arith.mulf %33, %34 : vector<16x128xbf16>
    %cst_13 = arith.constant 4.467770e-02 : bf16
    %36 = vector.broadcast %cst_13 : bf16 to vector<16x128xbf16>
    %37 = arith.mulf %36, %35 : vector<16x128xbf16>
    %38 = arith.addf %33, %37 : vector<16x128xbf16>
    %cst_14 = arith.constant 7.968750e-01 : bf16
    %39 = vector.broadcast %cst_14 : bf16 to vector<16x128xbf16>
    %40 = arith.mulf %39, %38 : vector<16x128xbf16>
    %41 = math.tanh %40 : vector<16x128xbf16>
    %cst_15 = arith.constant 1.000000e+00 : bf16
    %42 = vector.broadcast %cst_15 : bf16 to vector<16x128xbf16>
    %43 = arith.addf %42, %41 : vector<16x128xbf16>
    %cst_16 = arith.constant 5.000000e-01 : bf16
    %44 = vector.broadcast %cst_16 : bf16 to vector<16x128xbf16>
    %45 = arith.mulf %44, %43 : vector<16x128xbf16>
    %46 = arith.mulf %33, %45 : vector<16x128xbf16>
    %c0_17 = arith.constant 0 : index
    %c0_18 = arith.constant 0 : index
    %47 = vector.load %arg4[%c0_17, %c0_18] : memref<128x128xbf16, #tpu.memory_space<vmem>>, vector<128x128xbf16>
    %cst_19 = arith.constant dense<0.000000e+00> : vector<16x128xf32>
    %48 = tpu.matmul %46, %47, %cst_19 {dimension_numbers = #tpu.dot_dimension_numbers<[1], [0], [0], [1], [0, 0, 1, 1], [], []>} : vector<16x128xbf16>, vector<128x128xbf16>, vector<16x128xf32> -> vector<16x128xf32>
    %c0_20 = arith.constant 0 : index
    %c0_21 = arith.constant 0 : index
    %49 = vector.load %arg5[%c0_20, %c0_21] : memref<4x128xf32, #tpu.memory_space<vmem>>, vector<1x128xf32>
    %c1_22 = arith.constant 1 : index
    %c0_23 = arith.constant 0 : index
    %50 = vector.load %arg5[%c1_22, %c0_23] : memref<4x128xf32, #tpu.memory_space<vmem>>, vector<1x128xf32>
    %c2_24 = arith.constant 2 : index
    %c0_25 = arith.constant 0 : index
    %51 = vector.load %arg5[%c2_24, %c0_25] : memref<4x128xf32, #tpu.memory_space<vmem>>, vector<1x128xf32>
    %c3_26 = arith.constant 3 : index
    %c0_27 = arith.constant 0 : index
    %52 = vector.load %arg5[%c3_26, %c0_27] : memref<4x128xf32, #tpu.memory_space<vmem>>, vector<1x128xf32>
    %53 = vector.broadcast %49 : vector<1x128xf32> to vector<16x128xf32>
    %54 = arith.addf %48, %53 : vector<16x128xf32>
    %cst_28 = arith.constant dense<0.000000e+00> : vector<16xf32>
    %55 = vector.multi_reduction <add>, %54, %cst_28 [1] : vector<16x128xf32> to vector<16xf32>
    %56 = vector.shape_cast %55 : vector<16xf32> to vector<16x1xf32>
    %cst_29 = arith.constant 3.125000e-02 : f32
    %57 = vector.broadcast %cst_29 : f32 to vector<16x1xf32>
    %58 = arith.mulf %56, %57 : vector<16x1xf32>
    %59 = vector.broadcast %58 : vector<16x1xf32> to vector<16x128xf32>
    %60 = arith.subf %54, %59 : vector<16x128xf32>
    %61 = vector.broadcast %52 : vector<1x128xf32> to vector<16x128xf32>
    %62 = arith.mulf %60, %61 : vector<16x128xf32>
    %63 = arith.mulf %62, %62 : vector<16x128xf32>
    %cst_30 = arith.constant dense<0.000000e+00> : vector<16xf32>
    %64 = vector.multi_reduction <add>, %63, %cst_30 [1] : vector<16x128xf32> to vector<16xf32>
    %65 = vector.shape_cast %64 : vector<16xf32> to vector<16x1xf32>
    %cst_31 = arith.constant 3.125000e-02 : f32
    %66 = vector.broadcast %cst_31 : f32 to vector<16x1xf32>
    %67 = arith.mulf %65, %66 : vector<16x1xf32>
    %cst_32 = arith.constant 9.99999974E-6 : f32
    %68 = vector.broadcast %cst_32 : f32 to vector<16x1xf32>
    %69 = arith.addf %67, %68 : vector<16x1xf32>
    %70 = math.rsqrt %69 : vector<16x1xf32>
    %71 = vector.broadcast %70 : vector<16x1xf32> to vector<16x128xf32>
    %72 = arith.mulf %62, %71 : vector<16x128xf32>
    %73 = arith.truncf %72 : vector<16x128xf32> to vector<16x128xbf16>
    %74 = arith.truncf %50 : vector<1x128xf32> to vector<1x128xbf16>
    %75 = vector.broadcast %74 : vector<1x128xbf16> to vector<16x128xbf16>
    %76 = arith.mulf %73, %75 : vector<16x128xbf16>
    %77 = arith.truncf %51 : vector<1x128xf32> to vector<1x128xbf16>
    %78 = vector.broadcast %77 : vector<1x128xbf16> to vector<16x128xbf16>
    %79 = arith.addf %76, %78 : vector<16x128xbf16>
    %80 = arith.mulf %79, %79 : vector<16x128xbf16>
    %81 = arith.mulf %79, %80 : vector<16x128xbf16>
    %cst_33 = arith.constant 4.467770e-02 : bf16
    %82 = vector.broadcast %cst_33 : bf16 to vector<16x128xbf16>
    %83 = arith.mulf %82, %81 : vector<16x128xbf16>
    %84 = arith.addf %79, %83 : vector<16x128xbf16>
    %cst_34 = arith.constant 7.968750e-01 : bf16
    %85 = vector.broadcast %cst_34 : bf16 to vector<16x128xbf16>
    %86 = arith.mulf %85, %84 : vector<16x128xbf16>
    %87 = math.tanh %86 : vector<16x128xbf16>
    %cst_35 = arith.constant 1.000000e+00 : bf16
    %88 = vector.broadcast %cst_35 : bf16 to vector<16x128xbf16>
    %89 = arith.addf %88, %87 : vector<16x128xbf16>
    %cst_36 = arith.constant 5.000000e-01 : bf16
    %90 = vector.broadcast %cst_36 : bf16 to vector<16x128xbf16>
    %91 = arith.mulf %90, %89 : vector<16x128xbf16>
    %92 = arith.mulf %79, %91 : vector<16x128xbf16>
    %c0_37 = arith.constant 0 : index
    %c0_38 = arith.constant 0 : index
    %93 = vector.load %arg6[%c0_37, %c0_38] : memref<128x128xbf16, #tpu.memory_space<vmem>>, vector<128x128xbf16>
    %cst_39 = arith.constant dense<0.000000e+00> : vector<16x128xf32>
    %94 = tpu.matmul %92, %93, %cst_39 {dimension_numbers = #tpu.dot_dimension_numbers<[1], [0], [0], [1], [0, 0, 1, 1], [], []>} : vector<16x128xbf16>, vector<128x128xbf16>, vector<16x128xf32> -> vector<16x128xf32>
    %c0_40 = arith.constant 0 : index
    %c0_41 = arith.constant 0 : index
    %95 = vector.load %arg7[%c0_40, %c0_41] : memref<4x128xf32, #tpu.memory_space<vmem>>, vector<1x128xf32>
    %c1_42 = arith.constant 1 : index
    %c0_43 = arith.constant 0 : index
    %96 = vector.load %arg7[%c1_42, %c0_43] : memref<4x128xf32, #tpu.memory_space<vmem>>, vector<1x128xf32>
    %c2_44 = arith.constant 2 : index
    %c0_45 = arith.constant 0 : index
    %97 = vector.load %arg7[%c2_44, %c0_45] : memref<4x128xf32, #tpu.memory_space<vmem>>, vector<1x128xf32>
    %c3_46 = arith.constant 3 : index
    %c0_47 = arith.constant 0 : index
    %98 = vector.load %arg7[%c3_46, %c0_47] : memref<4x128xf32, #tpu.memory_space<vmem>>, vector<1x128xf32>
    %99 = vector.broadcast %95 : vector<1x128xf32> to vector<16x128xf32>
    %100 = arith.addf %94, %99 : vector<16x128xf32>
    %cst_48 = arith.constant dense<0.000000e+00> : vector<16xf32>
    %101 = vector.multi_reduction <add>, %100, %cst_48 [1] : vector<16x128xf32> to vector<16xf32>
    %102 = vector.shape_cast %101 : vector<16xf32> to vector<16x1xf32>
    %cst_49 = arith.constant 3.125000e-02 : f32
    %103 = vector.broadcast %cst_49 : f32 to vector<16x1xf32>
    %104 = arith.mulf %102, %103 : vector<16x1xf32>
    %105 = vector.broadcast %104 : vector<16x1xf32> to vector<16x128xf32>
    %106 = arith.subf %100, %105 : vector<16x128xf32>
    %107 = vector.broadcast %98 : vector<1x128xf32> to vector<16x128xf32>
    %108 = arith.mulf %106, %107 : vector<16x128xf32>
    %109 = arith.mulf %108, %108 : vector<16x128xf32>
    %cst_50 = arith.constant dense<0.000000e+00> : vector<16xf32>
    %110 = vector.multi_reduction <add>, %109, %cst_50 [1] : vector<16x128xf32> to vector<16xf32>
    %111 = vector.shape_cast %110 : vector<16xf32> to vector<16x1xf32>
    %cst_51 = arith.constant 3.125000e-02 : f32
    %112 = vector.broadcast %cst_51 : f32 to vector<16x1xf32>
    %113 = arith.mulf %111, %112 : vector<16x1xf32>
    %cst_52 = arith.constant 9.99999974E-6 : f32
    %114 = vector.broadcast %cst_52 : f32 to vector<16x1xf32>
    %115 = arith.addf %113, %114 : vector<16x1xf32>
    %116 = math.rsqrt %115 : vector<16x1xf32>
    %117 = vector.broadcast %116 : vector<16x1xf32> to vector<16x128xf32>
    %118 = arith.mulf %108, %117 : vector<16x128xf32>
    %119 = arith.truncf %118 : vector<16x128xf32> to vector<16x128xbf16>
    %120 = arith.truncf %96 : vector<1x128xf32> to vector<1x128xbf16>
    %121 = vector.broadcast %120 : vector<1x128xbf16> to vector<16x128xbf16>
    %122 = arith.mulf %119, %121 : vector<16x128xbf16>
    %123 = arith.truncf %97 : vector<1x128xf32> to vector<1x128xbf16>
    %124 = vector.broadcast %123 : vector<1x128xbf16> to vector<16x128xbf16>
    %125 = arith.addf %122, %124 : vector<16x128xbf16>
    %126 = arith.extf %125 : vector<16x128xbf16> to vector<16x128xf32>
    %c0_53 = arith.constant 0 : index
    %c0_54 = arith.constant 0 : index
    %127 = vector.load %arg8[%c0_53, %c0_54] : memref<16x128xf32, #tpu.memory_space<vmem>>, vector<16x128xf32>
    tpu.vector_store %arg8[%c0_53, %c0_54], %126 {strides = array<i32>} : memref<16x128xf32, #tpu.memory_space<vmem>>, vector<16x128xf32>,
    return
  }
  func.func @transform_0(%arg0: i32) -> (i32, i32) {
    %c0_i32 = arith.constant 0 : i32
    %c0_i32_0 = arith.constant 0 : i32
    return %arg0, %c0_i32 : i32, i32
  }
  func.func @transform_1(%arg0: i32) -> (i32, i32) {
    %c0_i32 = arith.constant 0 : i32
    %c0_i32_0 = arith.constant 0 : i32
    %c0_i32_1 = arith.constant 0 : i32
    return %c0_i32, %c0_i32_0 : i32, i32
  }
  func.func @transform_2(%arg0: i32) -> (i32, i32) {
    %c0_i32 = arith.constant 0 : i32
    %c0_i32_0 = arith.constant 0 : i32
    %c0_i32_1 = arith.constant 0 : i32
    return %c0_i32, %c0_i32_0 : i32, i32
  }
  func.func @transform_3(%arg0: i32) -> (i32, i32) {
    %c0_i32 = arith.constant 0 : i32
    %c0_i32_0 = arith.constant 0 : i32
    %c0_i32_1 = arith.constant 0 : i32
    return %c0_i32, %c0_i32_0 : i32, i32
  }
  func.func @transform_4(%arg0: i32) -> (i32, i32) {
    %c0_i32 = arith.constant 0 : i32
    %c0_i32_0 = arith.constant 0 : i32
    %c0_i32_1 = arith.constant 0 : i32
    return %c0_i32, %c0_i32_0 : i32, i32
  }
  func.func @transform_5(%arg0: i32) -> (i32, i32) {
    %c0_i32 = arith.constant 0 : i32
    %c0_i32_0 = arith.constant 0 : i32
    %c0_i32_1 = arith.constant 0 : i32
    return %c0_i32, %c0_i32_0 : i32, i32
  }
  func.func @transform_6(%arg0: i32) -> (i32, i32) {
    %c0_i32 = arith.constant 0 : i32
    %c0_i32_0 = arith.constant 0 : i32
    %c0_i32_1 = arith.constant 0 : i32
    return %c0_i32, %c0_i32_0 : i32, i32
  }
  func.func @transform_7(%arg0: i32) -> (i32, i32) {
    %c0_i32 = arith.constant 0 : i32
    %c0_i32_0 = arith.constant 0 : i32
    return %arg0, %c0_i32 : i32, i32
  }
}

</mosaic_0001>

<llo_original>
// kernel: tpu_custom_call.1
$region0: #{tpu_custom_call.1}
  #allocation0 [shape = 'u32[]', space=smem, size = 0x4, offset = 0x4, fixed_abs, tag = 'smem constant byte address 0x4 - core index']
  #allocation1 [shape = 'u32[144,128]{1,0:T(1,128)}', space=vmem, size = 0x12000, scoped, tag = 'internal scratch']
  %s0 = inlined_call_operand.hbm [shape: bf16[16,128], index: 0, kind: input, shape index: {}]
  %s1 = inlined_call_operand.hbm [shape: bf16[128,128], index: 1, kind: input, shape index: {}]
  %s2 = inlined_call_operand.hbm [shape: f32[4,128], index: 2, kind: input, shape index: {}]
  %s3 = inlined_call_operand.hbm [shape: bf16[128,128], index: 3, kind: input, shape index: {}]
  %s4 = inlined_call_operand.vmem [shape: f32[4,128], index: 4, kind: input, shape index: {}]
  %s5 = inlined_call_operand.hbm [shape: bf16[128,128], index: 5, kind: input, shape index: {}]
  %s6 = inlined_call_operand.vmem [shape: f32[4,128], index: 6, kind: input, shape index: {}]
  %s7 = inlined_call_operand.hbm [shape: f32[16,128], index: 7, kind: output, shape index: {}]
  %s8 = sld [smem:[#allocation0]]
  $region58: #{tpu_custom_call.1} parent=0
    _
  %s10 = ssub.s32 1, %s8
  %s11 = scalar_select 0, %s10, %s8
  $region1: #{tpu_custom_call.1} parent=0
    #allocation2 [shape = 'u8[4096]{0}', space=vmem, size = 0x1000, scoped, tag = 'input window, operand 0, single buffered']
    #allocation3 [shape = 's32[1]{0}', space=sflag, size = 0x4, scoped, tag = 'scoped memory for tpu_custom_call.1']
    #allocation4 [shape = 's32[1]{0}', space=sflag, size = 0x4, scoped, tag = 'scoped memory for tpu_custom_call.1']
    #allocation5 [shape = 'u8[32768]{0}', space=vmem, size = 0x8000, scoped, tag = 'input window, operand 1, single buffered']
    #allocation6 [shape = 's32[1]{0}', space=sflag, size = 0x4, scoped, tag = 'scoped memory for tpu_custom_call.1']
    #allocation7 [shape = 'u8[2048]{0}', space=vmem, size = 0x800, scoped, tag = 'input window, operand 2, single buffered']
    #allocation8 [shape = 'u8[32768]{0}', space=vmem, size = 0x8000, scoped, tag = 'input window, operand 3, single buffered']
    #allocation9 [shape = 's32[1]{0}', space=sflag, size = 0x4, scoped, tag = 'scoped memory for tpu_custom_call.1']
    #allocation10 [shape = 'u8[32768]{0}', space=vmem, size = 0x8000, scoped, tag = 'input window, operand 5, single buffered']
    #allocation11 [shape = 'u8[8192]{0}', space=vmem, size = 0x2000, scoped, tag = 'output window, operand 0, single buffered']
    %12 = vsyncpa [#allocation3], 0
    %13 = vsyncpa [#allocation6], 0
    %14 = vsyncpa [#allocation9], 0
    %15 = vsyncpa [#allocation4], 0
    // Predicated region
    $region2: #{tpu_custom_call.1} parent=1 // pred_check
      _
    $region3: #{tpu_custom_call.1} parent=1 // pred_check_branch
      %17 = sbr.rel (0) target = $region5
    $region4: #{tpu_custom_call.1} parent=1 // pred_region
      %s19 = ssub.s32 128, 128
      %20 = vsyncadd [#allocation3], %s19
      %s21 = sshll.u32 [#allocation2], 4
      %s22 = int_to_ptr.vmem [resolvable:$true] %s21
      %27 = dma.hbm_to_vmem [thread:$0]  %s0, 128, %s22, [#allocation3], 64, 64, 4
    $region5: #{tpu_custom_call.1} parent=1 // pred_fallthru
      _
    // Predicated region
    $region6: #{tpu_custom_call.1} parent=1 // pred_check
      _
    $region7: #{tpu_custom_call.1} parent=1 // pred_check_branch
      %29 = sbr.rel (0) target = $region9
    $region8: #{tpu_custom_call.1} parent=1 // pred_region
      %s31 = ssub.s32 1024, 1024
      %32 = vsyncadd [#allocation6], %s31
      %s33 = sshll.u32 [#allocation5], 4
      %s34 = int_to_ptr.vmem [resolvable:$true] %s33
      %39 = dma.hbm_to_vmem [thread:$0]  %s1, 1024, %s34, [#allocation6], 64, 64, 4
    $region9: #{tpu_custom_call.1} parent=1 // pred_fallthru
      _
    // Predicated region
    $region10: #{tpu_custom_call.1} parent=1 // pred_check
      _
    $region11: #{tpu_custom_call.1} parent=1 // pred_check_branch
      %41 = sbr.rel (0) target = $region13
    $region12: #{tpu_custom_call.1} parent=1 // pred_region
      %s43 = ssub.s32 64, 64
      %44 = vsyncadd [#allocation6], %s43
      %s46 = sshll.u32 [#allocation7], 4
      %s47 = int_to_ptr.vmem [resolvable:$true] %s46
      %49 = dma.hbm_to_vmem [thread:$0]  %s2, 64, %s47, [#allocation6]
    $region13: #{tpu_custom_call.1} parent=1 // pred_fallthru
      _
    // Predicated region
    $region14: #{tpu_custom_call.1} parent=1 // pred_check
      _
    $region15: #{tpu_custom_call.1} parent=1 // pred_check_branch
      %51 = sbr.rel (0) target = $region17
    $region16: #{tpu_custom_call.1} parent=1 // pred_region
      %s53 = ssub.s32 1024, 1024
      %54 = vsyncadd [#allocation9], %s53
      %s55 = sshll.u32 [#allocation8], 4
      %s56 = int_to_ptr.vmem [resolvable:$true] %s55
      %61 = dma.hbm_to_vmem [thread:$0]  %s3, 1024, %s56, [#allocation9], 64, 64, 4
    $region17: #{tpu_custom_call.1} parent=1 // pred_fallthru
      _
    // Predicated region
    $region18: #{tpu_custom_call.1} parent=1 // pred_check
      _
    $region19: #{tpu_custom_call.1} parent=1 // pred_check_branch
      %63 = sbr.rel (0) target = $region21
    $region20: #{tpu_custom_call.1} parent=1 // pred_region
      _
    $region21: #{tpu_custom_call.1} parent=1 // pred_fallthru
      _
    // Predicated region
    $region22: #{tpu_custom_call.1} parent=1 // pred_check
      _
    $region23: #{tpu_custom_call.1} parent=1 // pred_check_branch
      %65 = sbr.rel (0) target = $region25
    $region24: #{tpu_custom_call.1} parent=1 // pred_region
      %s67 = ssub.s32 1024, 1024
      %68 = vsyncadd [#allocation9], %s67
      %s69 = sshll.u32 [#allocation10], 4
      %s70 = int_to_ptr.vmem [resolvable:$true] %s69
      %75 = dma.hbm_to_vmem [thread:$0]  %s5, 1024, %s70, [#allocation9], 64, 64, 4
    $region25: #{tpu_custom_call.1} parent=1 // pred_fallthru
      _
    // Predicated region
    $region26: #{tpu_custom_call.1} parent=1 // pred_check
      _
    $region27: #{tpu_custom_call.1} parent=1 // pred_check_branch
      %77 = sbr.rel (0) target = $region29
    $region28: #{tpu_custom_call.1} parent=1 // pred_region
      _
    $region29: #{tpu_custom_call.1} parent=1 // pred_fallthru
      _
    // Predicated region
    $region30: #{tpu_custom_call.1} parent=1 // pred_check
      _
    $region31: #{tpu_custom_call.1} parent=1 // pred_check_branch
      %79 = sbr.rel (0) target = $region33
    $region32: #{tpu_custom_call.1} parent=1 // pred_region
      %80 = dma.done [#allocation3], 128
    $region33: #{tpu_custom_call.1} parent=1 // pred_fallthru
      _
    // Predicated region
    $region34: #{tpu_custom_call.1} parent=1 // pred_check
      _
    $region35: #{tpu_custom_call.1} parent=1 // pred_check_branch
      %82 = sbr.rel (0) target = $region37
    $region36: #{tpu_custom_call.1} parent=1 // pred_region
      %83 = dma.done [#allocation6], 1024
    $region37: #{tpu_custom_call.1} parent=1 // pred_fallthru
      _
    // Predicated region
    $region38: #{tpu_custom_call.1} parent=1 // pred_check
      _
    $region39: #{tpu_custom_call.1} parent=1 // pred_check_branch
      %85 = sbr.rel (0) target = $region41
    $region40: #{tpu_custom_call.1} parent=1 // pred_region
      %86 = dma.done [#allocation6], 64
    $region41: #{tpu_custom_call.1} parent=1 // pred_fallthru
      _
    // Predicated region
    $region42: #{tpu_custom_call.1} parent=1 // pred_check
      _
    $region43: #{tpu_custom_call.1} parent=1 // pred_check_branch
      %88 = sbr.rel (0) target = $region45
    $region44: #{tpu_custom_call.1} parent=1 // pred_region
      %89 = dma.done [#allocation9], 1024
    $region45: #{tpu_custom_call.1} parent=1 // pred_fallthru
      _
    // Predicated region
    $region46: #{tpu_custom_call.1} parent=1 // pred_check
      _
    $region47: #{tpu_custom_call.1} parent=1 // pred_check_branch
      %91 = sbr.rel (0) target = $region49
    $region48: #{tpu_custom_call.1} parent=1 // pred_region
      %92 = dma.done [#allocation9], 1024
    $region49: #{tpu_custom_call.1} parent=1 // pred_fallthru
      _
    %v98 = vld [vmem:[#allocation2] sm:$0xf]
    %v99 = vld [vmem:[#allocation2 + $0x4] sm:$0xf]
    %v100 = vld [vmem:[#allocation5] sm:$0xf]
    %v101 = vld [vmem:[#allocation5 + $0x4] sm:$0xf]
    %v102 = vld [vmem:[#allocation5 + $0x8] sm:$0xf]
    %v103 = vld [vmem:[#allocation5 + $0xc] sm:$0xf]
    %v104 = vld [vmem:[#allocation5 + $0x10] sm:$0xf]
    %v105 = vld [vmem:[#allocation5 + $0x14] sm:$0xf]
    %v106 = vld [vmem:[#allocation5 + $0x18] sm:$0xf]
    %v107 = vld [vmem:[#allocation5 + $0x1c] sm:$0xf]
    %v108 = vld [vmem:[#allocation5 + $0x20] sm:$0xf]
    %v109 = vld [vmem:[#allocation5 + $0x24] sm:$0xf]
    %v110 = vld [vmem:[#allocation5 + $0x28] sm:$0xf]
    %v111 = vld [vmem:[#allocation5 + $0x2c] sm:$0xf]
    %v112 = vld [vmem:[#allocation5 + $0x30] sm:$0xf]
    %v113 = vld [vmem:[#allocation5 + $0x34] sm:$0xf]
    %v114 = vld [vmem:[#allocation5 + $0x38] sm:$0xf]
    %v115 = vld [vmem:[#allocation5 + $0x3c] sm:$0xf]
    %v116 = vld [vmem:[#allocation7] sm:$0x1]
    %v117 = vld [vmem:[#allocation7 + $0x1] sm:$0x1]
    %v118 = vld [vmem:[#allocation7 + $0x2] sm:$0x1]
    %v119 = vld [vmem:[#allocation7 + $0x3] sm:$0x1]
    %v120 = vlaneseq
    %v121 = vshrl.u32 %v120, 7
    %v122 = vsub.s32 0, %v121
    %v123 = vrot.slane %v116, %v122
    %v126 = vunpack.c.l.b16 %v98
    %v127 = vunpack.c.l.b16 %v99
    %v128 = vpack.c.b16 %v127, %v126
    %v146 = vunpack.c.l.b16 %v100
    %v147 = vunpack.c.l.b16 %v101
    %v148 = vunpack.c.l.b16 %v102
    %v149 = vunpack.c.l.b16 %v103
    %v150 = vunpack.c.l.b16 %v104
    %v151 = vunpack.c.l.b16 %v105
    %v152 = vunpack.c.l.b16 %v106
    %v153 = vunpack.c.l.b16 %v107
    %v154 = vunpack.c.l.b16 %v108
    %v155 = vunpack.c.l.b16 %v109
    %v156 = vunpack.c.l.b16 %v110
    %v157 = vunpack.c.l.b16 %v111
    %v158 = vunpack.c.l.b16 %v112
    %v159 = vunpack.c.l.b16 %v113
    %v160 = vunpack.c.l.b16 %v114
    %v161 = vunpack.c.l.b16 %v115
    %v162 = vpack.c.b16 %v147, %v146
    %v163 = vpack.c.b16 %v149, %v148
    %v164 = vpack.c.b16 %v151, %v150
    %v165 = vpack.c.b16 %v153, %v152
    %v166 = vpack.c.b16 %v155, %v154
    %v167 = vpack.c.b16 %v157, %v156
    %v168 = vpack.c.b16 %v159, %v158
    %v169 = vpack.c.b16 %v161, %v160
    %178 = vmatprep.subr.bf16.mxu0 0
    %179 = vmatpush1.bf16.msra.mxu0 %v169
    %180 = vmatprep.subr.bf16.mxu0 0
    %181 = vmatpush1.bf16.msra.mxu0 %v168
    %182 = vmatprep.subr.bf16.mxu0 0
    %183 = vmatpush1.bf16.msra.mxu0 %v167
    %184 = vmatprep.subr.bf16.mxu0 0
    %185 = vmatpush1.bf16.msra.mxu0 %v166
    %186 = vmatprep.subr.bf16.mxu0 0
    %187 = vmatpush1.bf16.msra.mxu0 %v165
    %188 = vmatprep.subr.bf16.mxu0 0
    %189 = vmatpush1.bf16.msra.mxu0 %v164
    %190 = vmatprep.subr.bf16.mxu0 0
    %191 = vmatpush1.bf16.msra.mxu0 %v163
    %192 = vmatprep.subr.bf16.mxu0 0
    %193 = vmatpush1.bf16.msra.mxu0 %v162
    %194 = vmatprep.subr.bf16.mxu0 0
    %195 = vmatpush2.bf16.msra.mxu0 0
    %196 = vmatprep.subr.bf16.mxu0 0
    %197 = vmatpush2.bf16.msra.mxu0 0
    %198 = vmatprep.subr.bf16.mxu0 0
    %199 = vmatpush2.bf16.msra.mxu0 0
    %200 = vmatprep.subr.bf16.mxu0 0
    %201 = vmatpush2.bf16.msra.mxu0 0
    %202 = vmatprep.subr.bf16.mxu0 0
    %203 = vmatpush2.bf16.msra.mxu0 0
    %204 = vmatprep.subr.bf16.mxu0 0
    %205 = vmatpush2.bf16.msra.mxu0 0
    %206 = vmatprep.subr.bf16.mxu0 0
    %207 = vmatpush2.bf16.msra.mxu0 0
    %208 = vmatprep.subr.bf16.mxu0 0
    %209 = vmatpush2.bf16.msra.mxu0 0
    %210 = vmatprep.mubr.bf16.mxu0 0
    %211 = vmatmul.mubr.bf16.gmra.mxu0 %v128
    %v212 = vpop.f32.mrf.mxu0
    %v213 = vadd.f32 %v123, %v212
    %v214 = vpop.f32.mrf.mxu0
    %v215 = vpop.f32.mrf.mxu0
    %v216 = vadd.f32 %v123, %v215
    %v217 = vpop.f32.mrf.mxu0
    %218 = vdwg.mxu0
    %219 = vadd.xlane.f32.xlu0 %v213
    %v220 = vpop.xlane.xlu0 %219
    %221 = vadd.xlane.f32.xlu0 %v216
    %v222 = vpop.xlane.xlu0 %221
    %v223 = vmul.f32 %v220, 0.03125
    %v224 = vmul.f32 %v222, 0.03125
    %v225 = vsub.f32 %v213, %v223
    %v226 = vsub.f32 %v216, %v224
    %v227 = vlaneseq
    %v228 = vshrl.u32 %v227, 7
    %v229 = vsub.s32 0, %v228
    %v230 = vrot.slane %v119, %v229
    %v231 = vmul.f32 %v225, %v230
    %v232 = vmul.f32 %v226, %v230
    %v233 = vmul.f32 %v231, %v231
    %v234 = vmul.f32 %v232, %v232
    %235 = vadd.xlane.f32.xlu0 %v233
    %v236 = vpop.xlane.xlu0 %235
    %237 = vadd.xlane.f32.xlu0 %v234
    %v238 = vpop.xlane.xlu0 %237
    %v239 = vmul.f32 %v236, 0.03125
    %v240 = vmul.f32 %v238, 0.03125
    %v241 = vadd.f32 %v239, 1e-05
    %v242 = vadd.f32 %v240, 1e-05
    %v243 = vrsqrt.pop %v241
    %v244 = vrsqrt.pop %v242
    %v245 = vmul.f32 %v231, %v243
    %v246 = vmul.f32 %v232, %v244
    %v247 = vpack.c.bf16 %v246, %v245
    %v248 = vpack.c.bf16 %v117, %v117
    %v250 = vpack.i.b16 %v248, %v248
    %v252 = vlaneseq
    %v253 = vshrl.u32 %v252, 7
    %v254 = vsub.s32 0, %v253
    %v255 = vrot.slane %v250, %v254
    %v256 = vmul.bf16 %v247, %v255
    %v257 = vpack.c.bf16 %v118, %v118
    %v259 = vpack.i.b16 %v257, %v257
    %v261 = vlaneseq
    %v262 = vshrl.u32 %v261, 7
    %v263 = vsub.s32 0, %v262
    %v264 = vrot.slane %v259, %v263
    %v265 = vadd.bf16 %v256, %v264
    %v266 = vmul.bf16 %v265, %v265
    %v267 = vmul.bf16 %v265, %v266
    %v268 = vmul.bf16 %v267, 1027030327
    %v269 = vadd.bf16 %v265, %v268
    %v270 = vmul.bf16 %v269, 1061961548
    %v271 = vtanh.bf16.pop %v270
    %v272 = vadd.bf16 %v271, 1065369472
    %v273 = vmul.bf16 %v272, 1056980736
    %v274 = vmul.bf16 %v265, %v273
    %v275 = vld [vmem:[#allocation8] sm:$0xf]
    %v276 = vld [vmem:[#allocation8 + $0x4] sm:$0xf]
    %v277 = vld [vmem:[#allocation8 + $0x8] sm:$0xf]
    %v278 = vld [vmem:[#allocation8 + $0xc] sm:$0xf]
    %v279 = vld [vmem:[#allocation8 + $0x10] sm:$0xf]
    %v280 = vld [vmem:[#allocation8 + $0x14] sm:$0xf]
    %v281 = vld [vmem:[#allocation8 + $0x18] sm:$0xf]
    %v282 = vld [vmem:[#allocation8 + $0x1c] sm:$0xf]
    %v283 = vld [vmem:[#allocation8 + $0x20] sm:$0xf]
    %v284 = vld [vmem:[#allocation8 + $0x24] sm:$0xf]
    %v285 = vld [vmem:[#allocation8 + $0x28] sm:$0xf]
    %v286 = vld [vmem:[#allocation8 + $0x2c] sm:$0xf]
    %v287 = vld [vmem:[#allocation8 + $0x30] sm:$0xf]
    %v288 = vld [vmem:[#allocation8 + $0x34] sm:$0xf]
    %v289 = vld [vmem:[#allocation8 + $0x38] sm:$0xf]
    %v290 = vld [vmem:[#allocation8 + $0x3c] sm:$0xf]
    %v291 = vld [vmem:[%s4] sm:$0x1]
    %v292 = vld [vmem:[%s4 + $0x1] sm:$0x1]
    %v293 = vld [vmem:[%s4 + $0x2] sm:$0x1]
    %v294 = vld [vmem:[%s4 + $0x3] sm:$0x1]
    %v295 = vlaneseq
    %v296 = vshrl.u32 %v295, 7
    %v297 = vsub.s32 0, %v296
    %v298 = vrot.slane %v291, %v297
    %v315 = vunpack.c.l.b16 %v275
    %v316 = vunpack.c.l.b16 %v276
    %v317 = vunpack.c.l.b16 %v277
    %v318 = vunpack.c.l.b16 %v278
    %v319 = vunpack.c.l.b16 %v279
    %v320 = vunpack.c.l.b16 %v280
    %v321 = vunpack.c.l.b16 %v281
    %v322 = vunpack.c.l.b16 %v282
    %v323 = vunpack.c.l.b16 %v283
    %v324 = vunpack.c.l.b16 %v284
    %v325 = vunpack.c.l.b16 %v285
    %v326 = vunpack.c.l.b16 %v286
    %v327 = vunpack.c.l.b16 %v287
    %v328 = vunpack.c.l.b16 %v288
    %v329 = vunpack.c.l.b16 %v289
    %v330 = vunpack.c.l.b16 %v290
    %v331 = vpack.c.b16 %v316, %v315
    %v332 = vpack.c.b16 %v318, %v317
    %v333 = vpack.c.b16 %v320, %v319
    %v334 = vpack.c.b16 %v322, %v321
    %v335 = vpack.c.b16 %v324, %v323
    %v336 = vpack.c.b16 %v326, %v325
    %v337 = vpack.c.b16 %v328, %v327
    %v338 = vpack.c.b16 %v330, %v329
    %347 = vmatprep.subr.bf16.mxu0 0
    %348 = vmatpush1.bf16.msra.mxu0 %v338
    %349 = vmatprep.subr.bf16.mxu0 0
    %350 = vmatpush1.bf16.msra.mxu0 %v337
    %351 = vmatprep.subr.bf16.mxu0 0
    %352 = vmatpush1.bf16.msra.mxu0 %v336
    %353 = vmatprep.subr.bf16.mxu0 0
    %354 = vmatpush1.bf16.msra.mxu0 %v335
    %355 = vmatprep.subr.bf16.mxu0 0
    %356 = vmatpush1.bf16.msra.mxu0 %v334
    %357 = vmatprep.subr.bf16.mxu0 0
    %358 = vmatpush1.bf16.msra.mxu0 %v333
    %359 = vmatprep.subr.bf16.mxu0 0
    %360 = vmatpush1.bf16.msra.mxu0 %v332
    %361 = vmatprep.subr.bf16.mxu0 0
    %362 = vmatpush1.bf16.msra.mxu0 %v331
    %363 = vmatprep.subr.bf16.mxu0 0
    %364 = vmatpush2.bf16.msra.mxu0 0
    %365 = vmatprep.subr.bf16.mxu0 0
    %366 = vmatpush2.bf16.msra.mxu0 0
    %367 = vmatprep.subr.bf16.mxu0 0
    %368 = vmatpush2.bf16.msra.mxu0 0
    %369 = vmatprep.subr.bf16.mxu0 0
    %370 = vmatpush2.bf16.msra.mxu0 0
    %371 = vmatprep.subr.bf16.mxu0 0
    %372 = vmatpush2.bf16.msra.mxu0 0
    %373 = vmatprep.subr.bf16.mxu0 0
    %374 = vmatpush2.bf16.msra.mxu0 0
    %375 = vmatprep.subr.bf16.mxu0 0
    %376 = vmatpush2.bf16.msra.mxu0 0
    %377 = vmatprep.subr.bf16.mxu0 0
    %378 = vmatpush2.bf16.msra.mxu0 0
    %379 = vmatprep.mubr.bf16.mxu0 0
    %380 = vmatmul.mubr.bf16.gmra.mxu0 %v274
    %v381 = vpop.f32.mrf.mxu0
    %v382 = vadd.f32 %v298, %v381
    %v383 = vpop.f32.mrf.mxu0
    %v384 = vpop.f32.mrf.mxu0
    %v385 = vadd.f32 %v298, %v384
    %v386 = vpop.f32.mrf.mxu0
    %387 = vdwg.mxu0
    %388 = vadd.xlane.f32.xlu0 %v382
    %v389 = vpop.xlane.xlu0 %388
    %390 = vadd.xlane.f32.xlu0 %v385
    %v391 = vpop.xlane.xlu0 %390
    %v392 = vmul.f32 %v389, 0.03125
    %v393 = vmul.f32 %v391, 0.03125
    %v394 = vsub.f32 %v382, %v392
    %v395 = vsub.f32 %v385, %v393
    %v396 = vlaneseq
    %v397 = vshrl.u32 %v396, 7
    %v398 = vsub.s32 0, %v397
    %v399 = vrot.slane %v294, %v398
    %v400 = vmul.f32 %v394, %v399
    %v401 = vmul.f32 %v395, %v399
    %v402 = vmul.f32 %v400, %v400
    %v403 = vmul.f32 %v401, %v401
    %404 = vadd.xlane.f32.xlu0 %v402
    %v405 = vpop.xlane.xlu0 %404
    %406 = vadd.xlane.f32.xlu0 %v403
    %v407 = vpop.xlane.xlu0 %406
    %v408 = vmul.f32 %v405, 0.03125
    %v409 = vmul.f32 %v407, 0.03125
    %v410 = vadd.f32 %v408, 1e-05
    %v411 = vadd.f32 %v409, 1e-05
    %v412 = vrsqrt.pop %v410
    %v413 = vrsqrt.pop %v411
    %v414 = vmul.f32 %v400, %v412
    %v415 = vmul.f32 %v401, %v413
    %v416 = vpack.c.bf16 %v415, %v414
    %v417 = vpack.c.bf16 %v292, %v292
    %v419 = vpack.i.b16 %v417, %v417
    %v421 = vlaneseq
    %v422 = vshrl.u32 %v421, 7
    %v423 = vsub.s32 0, %v422
    %v424 = vrot.slane %v419, %v423
    %v425 = vmul.bf16 %v416, %v424
    %v426 = vpack.c.bf16 %v293, %v293
    %v428 = vpack.i.b16 %v426, %v426
    %v430 = vlaneseq
    %v431 = vshrl.u32 %v430, 7
    %v432 = vsub.s32 0, %v431
    %v433 = vrot.slane %v428, %v432
    %v434 = vadd.bf16 %v425, %v433
    %v435 = vmul.bf16 %v434, %v434
    %v436 = vmul.bf16 %v434, %v435
    %v437 = vmul.bf16 %v436, 1027030327
    %v438 = vadd.bf16 %v434, %v437
    %v439 = vmul.bf16 %v438, 1061961548
    %v440 = vtanh.bf16.pop %v439
    %v441 = vadd.bf16 %v440, 1065369472
    %v442 = vmul.bf16 %v441, 1056980736
    %v443 = vmul.bf16 %v434, %v442
    %v444 = vld [vmem:[#allocation10] sm:$0xf]
    %v445 = vld [vmem:[#allocation10 + $0x4] sm:$0xf]
    %v446 = vld [vmem:[#allocation10 + $0x8] sm:$0xf]
    %v447 = vld [vmem:[#allocation10 + $0xc] sm:$0xf]
    %v448 = vld [vmem:[#allocation10 + $0x10] sm:$0xf]
    %v449 = vld [vmem:[#allocation10 + $0x14] sm:$0xf]
    %v450 = vld [vmem:[#allocation10 + $0x18] sm:$0xf]
    %v451 = vld [vmem:[#allocation10 + $0x1c] sm:$0xf]
    %v452 = vld [vmem:[#allocation10 + $0x20] sm:$0xf]
    %v453 = vld [vmem:[#allocation10 + $0x24] sm:$0xf]
    %v454 = vld [vmem:[#allocation10 + $0x28] sm:$0xf]
    %v455 = vld [vmem:[#allocation10 + $0x2c] sm:$0xf]
    %v456 = vld [vmem:[#allocation10 + $0x30] sm:$0xf]
    %v457 = vld [vmem:[#allocation10 + $0x34] sm:$0xf]
    %v458 = vld [vmem:[#allocation10 + $0x38] sm:$0xf]
    %v459 = vld [vmem:[#allocation10 + $0x3c] sm:$0xf]
    %v460 = vld [vmem:[%s6] sm:$0x1]
    %v461 = vld [vmem:[%s6 + $0x1] sm:$0x1]
    %v462 = vld [vmem:[%s6 + $0x2] sm:$0x1]
    %v463 = vld [vmem:[%s6 + $0x3] sm:$0x1]
    %v464 = vlaneseq
    %v465 = vshrl.u32 %v464, 7
    %v466 = vsub.s32 0, %v465
    %v467 = vrot.slane %v460, %v466
    %v484 = vunpack.c.l.b16 %v444
    %v485 = vunpack.c.l.b16 %v445
    %v486 = vunpack.c.l.b16 %v446
    %v487 = vunpack.c.l.b16 %v447
    %v488 = vunpack.c.l.b16 %v448
    %v489 = vunpack.c.l.b16 %v449
    %v490 = vunpack.c.l.b16 %v450
    %v491 = vunpack.c.l.b16 %v451
    %v492 = vunpack.c.l.b16 %v452
    %v493 = vunpack.c.l.b16 %v453
    %v494 = vunpack.c.l.b16 %v454
    %v495 = vunpack.c.l.b16 %v455
    %v496 = vunpack.c.l.b16 %v456
    %v497 = vunpack.c.l.b16 %v457
    %v498 = vunpack.c.l.b16 %v458
    %v499 = vunpack.c.l.b16 %v459
    %v500 = vpack.c.b16 %v485, %v484
    %v501 = vpack.c.b16 %v487, %v486
    %v502 = vpack.c.b16 %v489, %v488
    %v503 = vpack.c.b16 %v491, %v490
    %v504 = vpack.c.b16 %v493, %v492
    %v505 = vpack.c.b16 %v495, %v494
    %v506 = vpack.c.b16 %v497, %v496
    %v507 = vpack.c.b16 %v499, %v498
    %516 = vmatprep.subr.bf16.mxu0 0
    %517 = vmatpush1.bf16.msra.mxu0 %v507
    %518 = vmatprep.subr.bf16.mxu0 0
    %519 = vmatpush1.bf16.msra.mxu0 %v506
    %520 = vmatprep.subr.bf16.mxu0 0
    %521 = vmatpush1.bf16.msra.mxu0 %v505
    %522 = vmatprep.subr.bf16.mxu0 0
    %523 = vmatpush1.bf16.msra.mxu0 %v504
    %524 = vmatprep.subr.bf16.mxu0 0
    %525 = vmatpush1.bf16.msra.mxu0 %v503
    %526 = vmatprep.subr.bf16.mxu0 0
    %527 = vmatpush1.bf16.msra.mxu0 %v502
    %528 = vmatprep.subr.bf16.mxu0 0
    %529 = vmatpush1.bf16.msra.mxu0 %v501
    %530 = vmatprep.subr.bf16.mxu0 0
    %531 = vmatpush1.bf16.msra.mxu0 %v500
    %532 = vmatprep.subr.bf16.mxu0 0
    %533 = vmatpush2.bf16.msra.mxu0 0
    %534 = vmatprep.subr.bf16.mxu0 0
    %535 = vmatpush2.bf16.msra.mxu0 0
    %536 = vmatprep.subr.bf16.mxu0 0
    %537 = vmatpush2.bf16.msra.mxu0 0
    %538 = vmatprep.subr.bf16.mxu0 0
    %539 = vmatpush2.bf16.msra.mxu0 0
    %540 = vmatprep.subr.bf16.mxu0 0
    %541 = vmatpush2.bf16.msra.mxu0 0
    %542 = vmatprep.subr.bf16.mxu0 0
    %543 = vmatpush2.bf16.msra.mxu0 0
    %544 = vmatprep.subr.bf16.mxu0 0
    %545 = vmatpush2.bf16.msra.mxu0 0
    %546 = vmatprep.subr.bf16.mxu0 0
    %547 = vmatpush2.bf16.msra.mxu0 0
    %548 = vmatprep.mubr.bf16.mxu0 0
    %549 = vmatmul.mubr.bf16.gmra.mxu0 %v443
    %v550 = vpop.f32.mrf.mxu0
    %v551 = vadd.f32 %v467, %v550
    %v552 = vpop.f32.mrf.mxu0
    %v553 = vpop.f32.mrf.mxu0
    %v554 = vadd.f32 %v467, %v553
    %v555 = vpop.f32.mrf.mxu0
    %556 = vdwg.mxu0
    %557 = vadd.xlane.f32.xlu0 %v551
    %v558 = vpop.xlane.xlu0 %557
    %559 = vadd.xlane.f32.xlu0 %v554
    %v560 = vpop.xlane.xlu0 %559
    %v561 = vmul.f32 %v558, 0.03125
    %v562 = vmul.f32 %v560, 0.03125
    %v563 = vsub.f32 %v551, %v561
    %v564 = vsub.f32 %v554, %v562
    %v565 = vlaneseq
    %v566 = vshrl.u32 %v565, 7
    %v567 = vsub.s32 0, %v566
    %v568 = vrot.slane %v463, %v567
    %v569 = vmul.f32 %v563, %v568
    %v570 = vmul.f32 %v564, %v568
    %v571 = vmul.f32 %v569, %v569
    %v572 = vmul.f32 %v570, %v570
    %573 = vadd.xlane.f32.xlu0 %v571
    %v574 = vpop.xlane.xlu0 %573
    %575 = vadd.xlane.f32.xlu0 %v572
    %v576 = vpop.xlane.xlu0 %575
    %v577 = vmul.f32 %v574, 0.03125
    %v578 = vmul.f32 %v576, 0.03125
    %v579 = vadd.f32 %v577, 1e-05
    %v580 = vadd.f32 %v578, 1e-05
    %v581 = vrsqrt.pop %v579
    %v582 = vrsqrt.pop %v580
    %v583 = vmul.f32 %v569, %v581
    %v584 = vmul.f32 %v570, %v582
    %v585 = vpack.c.bf16 %v584, %v583
    %v586 = vpack.c.bf16 %v461, %v461
    %v588 = vpack.i.b16 %v586, %v586
    %v590 = vlaneseq
    %v591 = vshrl.u32 %v590, 7
    %v592 = vsub.s32 0, %v591
    %v593 = vrot.slane %v588, %v592
    %v594 = vmul.bf16 %v585, %v593
    %v595 = vpack.c.bf16 %v462, %v462
    %v597 = vpack.i.b16 %v595, %v595
    %v599 = vlaneseq
    %v600 = vshrl.u32 %v599, 7
    %v601 = vsub.s32 0, %v600
    %v602 = vrot.slane %v597, %v601
    %v603 = vadd.bf16 %v594, %v602
    %v604 = vunpack.c.l.bf16 %v603
    %v605 = vunpack.c.h.bf16 %v603
    %606 = vst [vmem:[#allocation11] sm:$0xff] %v604
    %607 = vst [vmem:[#allocation11 + $0x8] sm:$0xff] %v605
    // Predicated region
    $region50: #{tpu_custom_call.1} parent=1 // pred_check
      _
    $region51: #{tpu_custom_call.1} parent=1 // pred_check_branch
      %609 = sbr.rel (0) target = $region53
    $region52: #{tpu_custom_call.1} parent=1 // pred_region
      %s611 = ssub.s32 256, 256
      %612 = vsyncadd [#allocation4], %s611
      %s613 = sshll.u32 [#allocation11], 4
      %s614 = int_to_ptr.vmem [resolvable:$true] %s613
      %619 = dma.vmem_to_hbm [thread:$0]  %s614, 256, %s7, [#allocation4], 128, 128, 8
    $region53: #{tpu_custom_call.1} parent=1 // pred_fallthru
      _
    // Predicated region
    $region54: #{tpu_custom_call.1} parent=1 // pred_check
      _
    $region55: #{tpu_custom_call.1} parent=1 // pred_check_branch
      %621 = sbr.rel (0) target = $region57
    $region56: #{tpu_custom_call.1} parent=1 // pred_region
      %622 = dma.done [#allocation4], 256
    $region57: #{tpu_custom_call.1} parent=1 // pred_fallthru
      _
    %623 = vsyncpa [#allocation3], 1
    %624 = vsyncpa [#allocation6], 1
    %625 = vsyncpa [#allocation9], 1
    %626 = vsyncpa [#allocation4], 1

</llo_original>
